<compile_context>
chip_gen: v5e
topology: v5e:2x2
jax: 0.10.0
libtpu: 0.0.40
codegen_flags: <defaults>
</compile_context>

<pallas_src>
import jax
import jax.numpy as jnp
from jax.experimental import pallas as pl
from jax.experimental.pallas import tpu as pltpu

Dim_capsule = 16
Num_capsule = 10
num_classes = 2
IN_FEATURES = Num_capsule * Dim_capsule  # 160


def _round_up(v, m):
    return ((v + m - 1) // m) * m


def _dense_sigmoid_kernel(x_ref, w_ref, b_ref, o_ref):
    # x_ref: (TILE_B, 160)  w_ref: (160, 2) f32  b_ref: (1, 2) f32  o_ref: (TILE_B, 2) f32
    x = x_ref[...].astype(jnp.float32)            # full f32 head precision
    y = jnp.dot(x, w_ref[...], preferred_element_type=jnp.float32) + b_ref[...]
    # Exact sigmoid: kernel is DMA-bound, EUP exp + VPU divide are free.
    o_ref[...] = (1.0 / (1.0 + jnp.exp(-y))).astype(o_ref.dtype)


def _choose_tile_b(B, itemsize, tile_b_max=None):
    # Sublane granularity: 16 rows for 2-byte dtypes, 8 rows for 4-byte dtypes.
    min_rows = 16 if itemsize == 2 else 8
    if tile_b_max is None:
        # VMEM budget (double-buffered, 160 lanes pad to 256, out 2 lanes pad to 128):
        #   bf16 8192: in 2*8192*256*2 = 8 MiB, out 2*8192*128*4 = 8 MiB  -> 16 MiB
        #   f32  4096: in 2*4096*256*4 = 8 MiB, out 2*4096*128*4 = 4 MiB  -> 12 MiB
        tile_b_max = 8192 if itemsize == 2 else 4096
    # >= 2 grid steps whenever B permits: pipelining everywhere, megacore on v7x.
    n_steps = max(pl.cdiv(B, tile_b_max), 2 if B >= 2 * min_rows else 1)
    tile_b = _round_up(pl.cdiv(B, n_steps), min_rows)
    return max(min(tile_b, tile_b_max), min_rows)


def dense_layer_forward(x, weight, bias, *, tile_b=None):
    """Capsule Dense_Layer forward.

    x:      (B, Num_capsule, Dim_capsule), float32 or bfloat16 (bf16 halves the
            HBM read; weight/bias/accumulation stay float32 either way).
    weight: (IN_FEATURES, num_classes)  -- torch Linear weight, transposed.
    bias:   (num_classes,)
    returns (B, num_classes) float32, sigmoid probabilities.
    """
    B = x.shape[0]
    x_flat = x.reshape(B, -1)                     # same as torch .view(B, -1)
    assert x_flat.shape[1] == IN_FEATURES

    # TODO(synk): Dropout(p=0.25) omitted (eval mode => identity). Training mode
    # needs in-kernel pltpu.prng_seed / pltpu.prng_random_bits + 1/(1-p) scaling.

    w = weight.astype(jnp.float32)                # (160, 2): tiny, VMEM-resident
    b2d = bias.astype(jnp.float32).reshape(1, num_classes)

    tb = _choose_tile_b(B, x_flat.dtype.itemsize, tile_b)
    grid = (pl.cdiv(B, tb),)                      # ragged last block: Pallas masks writeback

    cost = pl.CostEstimate(
        flops=2 * B * IN_FEATURES * num_classes,
        transcendentals=B * num_classes,
        bytes_accessed=(B * IN_FEATURES * x_flat.dtype.itemsize
                        + IN_FEATURES * num_classes * 4
                        + num_classes * 4
                        + B * num_classes * 4),
    )

    out = pl.pallas_call(
        _dense_sigmoid_kernel,
        out_shape=jax.ShapeDtypeStruct((B, num_classes), jnp.float32),
        grid_spec=pltpu.PrefetchScalarGridSpec(
            num_scalar_prefetch=0,
            grid=grid,
            in_specs=[
                # Batch-tiled activations: one (tb, 160) block per grid step.
                pl.BlockSpec((tb, IN_FEATURES), lambda i: (i, 0)),
                # Weight / bias: constant index_map => stay resident in VMEM.
                pl.BlockSpec((IN_FEATURES, num_classes), lambda i: (0, 0)),
                pl.BlockSpec((1, num_classes), lambda i: (0, 0)),
            ],
            # TODO(synk): output last dim is 2 (<128 lanes) => lane-sparse stores;
            # a lane-dense (B*2/128, 128) slab view would save ~2.5% of traffic.
            out_specs=pl.BlockSpec((tb, num_classes), lambda i: (i, 0)),
        ),
        compiler_params=pltpu.CompilerParams(
            dimension_semantics=("parallel",),    # batch tiles independent -> megacore on v7x
            vmem_limit_bytes=32 << 20,            # safe on v5e/v6e/v7x, covers the big tiles
        ),
        cost_estimate=cost,
    )(x_flat, w, b2d)

    return out


if __name__ == "__main__":
    key = jax.random.PRNGKey(0)
    kx, kw, kb = jax.random.split(key, 3)

    # Deterministic param init (mimics nn.Linear's uniform(-1/sqrt(in), 1/sqrt(in))).
    bound = 1.0 / (IN_FEATURES ** 0.5)
    weight = jax.random.uniform(kw, (IN_FEATURES, num_classes),
                                minval=-bound, maxval=bound, dtype=jnp.float32)
    bias = jax.random.uniform(kb, (num_classes,),
                              minval=-bound, maxval=bound, dtype=jnp.float32)

    def ref(xv):
        return jax.nn.sigmoid(
            xv.reshape(xv.shape[0], -1).astype(jnp.float32) @ weight + bias)

    # Small-batch f32 path (module-spec shapes).
    batch = 2
    x_f32 = jax.random.normal(kx, (batch, Num_capsule, Dim_capsule), dtype=jnp.float32)
    out_f32 = jax.block_until_ready(dense_layer_forward(x_f32, weight, bias))
    assert out_f32.shape == (batch, num_classes)
    assert jnp.allclose(out_f32, ref(x_f32), atol=1e-5), "f32 path mismatch vs reference"

    # bf16 activation path (recommended feed: upstream capsule output kept bf16).
    x_bf16 = x_f32.astype(jnp.bfloat16)
    out_bf16 = jax.block_until_ready(dense_layer_forward(x_bf16, weight, bias))
    assert out_bf16.shape == (batch, num_classes)
    assert jnp.allclose(out_bf16, ref(x_bf16), atol=1e-5), "bf16 path mismatch vs reference"

    # Larger, non-multiple batch: exercises the multi-step grid + masked ragged
    # last block (no jnp.pad copy of x anymore).
    batch2 = 300
    x_big = jax.random.normal(kx, (batch2, Num_capsule, Dim_capsule), dtype=jnp.float32)
    out_big = jax.block_until_ready(dense_layer_forward(x_big, weight, bias))
    assert out_big.shape == (batch2, num_classes)
    assert jnp.allclose(out_big, ref(x_big), atol=1e-5), "ragged-batch mismatch vs reference"

    print("KERNEL_OK")
</pallas_src>

<mosaic_0001>
module attributes {stable_mosaic.version = 11 : i64} {
  func.func @_dense_sigmoid_kernel(%arg0: i32, %arg1: memref<8x160xf32, #tpu.memory_space<vmem>>, %arg2: memref<160x2xf32, #tpu.memory_space<vmem>>, %arg3: memref<1x2xf32, #tpu.memory_space<vmem>>, %arg4: memref<8x2xf32, #tpu.memory_space<vmem>>) attributes {dimension_semantics = [#tpu.dimension_semantics<parallel>], iteration_bounds = array<i64: 1>, scalar_prefetch = 0 : i64, scratch_operands = 0 : i64, tpu.core_type = #tpu.core_type<tc>, window_params = [{transform_indices = @transform_0, window_bounds = array<i64: 8, 160>}, {pipeline_mode = #tpu.pipeline_mode<synchronous>, transform_indices = @transform_1, window_bounds = array<i64: 160, 2>}, {pipeline_mode = #tpu.pipeline_mode<synchronous>, transform_indices = @transform_2, window_bounds = array<i64: 1, 2>}, {transform_indices = @transform_3, window_bounds = array<i64: 8, 2>}]} {
    %c0 = arith.constant 0 : index
    %c0_0 = arith.constant 0 : index
    %0 = vector.load %arg1[%c0, %c0_0] : memref<8x160xf32, #tpu.memory_space<vmem>>, vector<8x160xf32>
    %c0_1 = arith.constant 0 : index
    %c0_2 = arith.constant 0 : index
    %1 = vector.load %arg2[%c0_1, %c0_2] : memref<160x2xf32, #tpu.memory_space<vmem>>, vector<160x2xf32>
    %cst = arith.constant dense<0.000000e+00> : vector<8x2xf32>
    %2 = tpu.matmul %0, %1, %cst {dimension_numbers = #tpu.dot_dimension_numbers<[1], [0], [0], [1], [0, 0, 1, 1], [], []>} : vector<8x160xf32>, vector<160x2xf32>, vector<8x2xf32> -> vector<8x2xf32>
    %c0_3 = arith.constant 0 : index
    %c0_4 = arith.constant 0 : index
    %3 = vector.load %arg3[%c0_3, %c0_4] : memref<1x2xf32, #tpu.memory_space<vmem>>, vector<1x2xf32>
    %4 = vector.broadcast %3 : vector<1x2xf32> to vector<8x2xf32>
    %5 = arith.addf %2, %4 : vector<8x2xf32>
    %cst_5 = arith.constant 0.000000e+00 : f32
    %6 = vector.broadcast %cst_5 : f32 to vector<8x2xf32>
    %7 = arith.subf %6, %5 : vector<8x2xf32>
    %8 = math.exp %7 : vector<8x2xf32>
    %cst_6 = arith.constant 1.000000e+00 : f32
    %9 = vector.broadcast %cst_6 : f32 to vector<8x2xf32>
    %10 = arith.addf %9, %8 : vector<8x2xf32>
    %cst_7 = arith.constant 1.000000e+00 : f32
    %11 = vector.broadcast %cst_7 : f32 to vector<8x2xf32>
    %12 = arith.divf %11, %10 : vector<8x2xf32>
    %c0_8 = arith.constant 0 : index
    %c0_9 = arith.constant 0 : index
    %13 = vector.load %arg4[%c0_8, %c0_9] : memref<8x2xf32, #tpu.memory_space<vmem>>, vector<8x2xf32>
    tpu.vector_store %arg4[%c0_8, %c0_9], %12 {strides = array<i32>} : memref<8x2xf32, #tpu.memory_space<vmem>>, vector<8x2xf32>,
    return
  }
  func.func @transform_0(%arg0: i32) -> (i32, i32) {
    %c0_i32 = arith.constant 0 : i32
    %c0_i32_0 = arith.constant 0 : i32
    return %arg0, %c0_i32 : i32, i32
  }
  func.func @transform_1(%arg0: i32) -> (i32, i32) {
    %c0_i32 = arith.constant 0 : i32
    %c0_i32_0 = arith.constant 0 : i32
    %c0_i32_1 = arith.constant 0 : i32
    return %c0_i32, %c0_i32_0 : i32, i32
  }
  func.func @transform_2(%arg0: i32) -> (i32, i32) {
    %c0_i32 = arith.constant 0 : i32
    %c0_i32_0 = arith.constant 0 : i32
    %c0_i32_1 = arith.constant 0 : i32
    return %c0_i32, %c0_i32_0 : i32, i32
  }
  func.func @transform_3(%arg0: i32) -> (i32, i32) {
    %c0_i32 = arith.constant 0 : i32
    %c0_i32_0 = arith.constant 0 : i32
    return %arg0, %c0_i32 : i32, i32
  }
}

</mosaic_0001>

<llo_original>
// kernel: tpu_custom_call.1
$region0: #{tpu_custom_call.1}
  #allocation0 [shape = 'u32[]', space=smem, size = 0x4, offset = 0x4, fixed_abs, tag = 'smem constant byte address 0x4 - core index']
  #allocation1 [shape = 'u32[72,128]{1,0:T(1,128)}', space=vmem, size = 0x9000, scoped, tag = 'internal scratch']
  %s0 = inlined_call_operand.vmem [shape: f32[2,160], index: 0, kind: input, shape index: {}]
  %s1 = inlined_call_operand.vmem [shape: f32[160,2], index: 1, kind: input, shape index: {}]
  %s2 = inlined_call_operand.vmem [shape: f32[1,2], index: 2, kind: input, shape index: {}]
  %s3 = inlined_call_operand.hbm [shape: f32[2,2], index: 3, kind: output, shape index: {}]
  %s4 = sld [smem:[#allocation0]]
  $region22: #{tpu_custom_call.1} parent=0
    _
  %s6 = ssub.s32 1, %s4
  %s7 = scalar_select 0, %s6, %s4
  $region1: #{tpu_custom_call.1} parent=0
    #allocation2 [shape = 'u8[4096]{0}', space=vmem, size = 0x1000, scoped, tag = 'output window, operand 0, single buffered']
    #allocation3 [shape = 's32[1]{0}', space=sflag, size = 0x4, scoped, tag = 'scoped memory for tpu_custom_call.1']
    %8 = vsyncpa [#allocation3], 0
    // Predicated region
    $region2: #{tpu_custom_call.1} parent=1 // pred_check
      _
    $region3: #{tpu_custom_call.1} parent=1 // pred_check_branch
      %10 = sbr.rel (0) target = $region5
    $region4: #{tpu_custom_call.1} parent=1 // pred_region
      _
    $region5: #{tpu_custom_call.1} parent=1 // pred_fallthru
      _
    // Predicated region
    $region6: #{tpu_custom_call.1} parent=1 // pred_check
      _
    $region7: #{tpu_custom_call.1} parent=1 // pred_check_branch
      %12 = sbr.rel (0) target = $region9
    $region8: #{tpu_custom_call.1} parent=1 // pred_region
      _
    $region9: #{tpu_custom_call.1} parent=1 // pred_fallthru
      _
    // Predicated region
    $region10: #{tpu_custom_call.1} parent=1 // pred_check
      _
    $region11: #{tpu_custom_call.1} parent=1 // pred_check_branch
      %14 = sbr.rel (0) target = $region13
    $region12: #{tpu_custom_call.1} parent=1 // pred_region
      _
    $region13: #{tpu_custom_call.1} parent=1 // pred_fallthru
      _
    %v15 = vld [vmem:[%s0] sm:$0xf]
    %v16 = vld [vmem:[%s0 + $0x4] sm:$0xf]
    %v17 = vld [vmem:[%s0 + $0x8] sm:$0xf]
    %v18 = vld [vmem:[%s0 + $0xc] sm:$0xf]
    %v19 = vld [vmem:[%s1] sm:$0xff]
    %v20 = vld [vmem:[%s1 + $0x8] sm:$0xff]
    %v21 = vld [vmem:[%s1 + $0x10] sm:$0xff]
    %v22 = vld [vmem:[%s1 + $0x18] sm:$0xff]
    %v23 = vld [vmem:[%s1 + $0x20] sm:$0xff]
    %v24 = vld [vmem:[%s1 + $0x28] sm:$0xff]
    %v25 = vld [vmem:[%s1 + $0x30] sm:$0xff]
    %v26 = vld [vmem:[%s1 + $0x38] sm:$0xff]
    %v27 = vld [vmem:[%s1 + $0x40] sm:$0xff]
    %v28 = vld [vmem:[%s1 + $0x48] sm:$0xff]
    %v29 = vld [vmem:[%s1 + $0x50] sm:$0xff]
    %v30 = vld [vmem:[%s1 + $0x58] sm:$0xff]
    %v31 = vld [vmem:[%s1 + $0x60] sm:$0xff]
    %v32 = vld [vmem:[%s1 + $0x68] sm:$0xff]
    %v33 = vld [vmem:[%s1 + $0x70] sm:$0xff]
    %v34 = vld [vmem:[%s1 + $0x78] sm:$0xff]
    %v35 = vld [vmem:[%s1 + $0x80] sm:$0xff]
    %v36 = vld [vmem:[%s1 + $0x88] sm:$0xff]
    %v37 = vld [vmem:[%s1 + $0x90] sm:$0xff]
    %v38 = vld [vmem:[%s1 + $0x98] sm:$0xff]
    %v39 = vld [vmem:[%s2] sm:$0x1]
    %v41 = vperm.slane %v39, 0
    %47 = vst [vmem:[#allocation1] ss:$4 sm:$0xff] %v15
    %s48 = scalar_lea.vmem [#allocation1], 1
    %49 = vst [vmem:[%s48] ss:$4 sm:$0xff] %v16
    %s50 = scalar_lea.vmem [#allocation1], 2
    %51 = vst [vmem:[%s50] ss:$4 sm:$0xff] %v17
    %s52 = scalar_lea.vmem [#allocation1], 3
    %53 = vst [vmem:[%s52] ss:$4 sm:$0xff] %v18
    %v54 = vld.sshfl [vmem:[#allocation1] sm:$0xff pattern:$0x73625140]
    %v55 = vld.sshfl [vmem:[#allocation1 + $0x8] sm:$0xff pattern:$0x73625140]
    %vm57 = vcmask 261120
    %v58 = vsel %vm57, %v55, 0
    %60 = vmatpush.msra.mxu0 %v34
    %61 = vmatpush.msra.mxu0 %v33
    %62 = vmatpush.msra.mxu0 %v32
    %63 = vmatpush.msra.mxu0 %v31
    %64 = vmatpush.msra.mxu0 %v30
    %65 = vmatpush.msra.mxu0 %v29
    %66 = vmatpush.msra.mxu0 %v28
    %67 = vmatpush.msra.mxu0 %v27
    %68 = vmatpush.msra.mxu0 %v26
    %69 = vmatpush.msra.mxu0 %v25
    %70 = vmatpush.msra.mxu0 %v24
    %71 = vmatpush.msra.mxu0 %v23
    %72 = vmatpush.msra.mxu0 %v22
    %73 = vmatpush.msra.mxu0 %v21
    %74 = vmatpush.msra.mxu0 %v20
    %75 = vmatpush.msra.mxu0 %v19
    %76 = vmatmul.f32.gmra.mxu0 %v54
    %v77 = vpop.f32.mrf.mxu0
    %v78 = vadd.f32 %v41, %v77
    %79 = vdwg.mxu0
    %80 = vmatpush.msra.mxu0 0.0
    %81 = vmatpush.msra.mxu0 0.0
    %82 = vmatpush.msra.mxu0 0.0
    %83 = vmatpush.msra.mxu0 0.0
    %84 = vmatpush.msra.mxu0 0.0
    %85 = vmatpush.msra.mxu0 0.0
    %86 = vmatpush.msra.mxu0 0.0
    %87 = vmatpush.msra.mxu0 0.0
    %88 = vmatpush.msra.mxu0 0.0
    %89 = vmatpush.msra.mxu0 0.0
    %90 = vmatpush.msra.mxu0 0.0
    %91 = vmatpush.msra.mxu0 0.0
    %92 = vmatpush.msra.mxu0 %v38
    %93 = vmatpush.msra.mxu0 %v37
    %94 = vmatpush.msra.mxu0 %v36
    %95 = vmatpush.msra.mxu0 %v35
    %96 = vmatmul.f32.gmra.mxu0 %v58
    %v97 = vpop.f32.mrf.mxu0
    %v98 = vadd.f32 %v78, %v97
    %99 = vdwg.mxu0
    %v100 = vsub.f32 0.0, %v98
    %v101 = vmul.f32 %v100, 1.442695
    %v102 = vpow.pop %v101
    %v103 = vadd.f32 %v102, 1.0
    %v104 = vrcp.pop %v103
    %v105 = vmul.f32 %v103, %v104
    %v106 = vsub.f32 1.0, %v105
    %v107 = vmul.f32 %v104, %v106
    %v108 = vadd.f32 %v104, %v107
    %vm109 = vweird.f32 %v103
    %vm110 = vweird.f32 %v104
    %vm111 = vmor %vm109, %vm110
    %v112 = vsel %vm111, %v104, %v108
    %v113 = vand.u32 2147483647, %v103
    %vm114 = vcmp.eq.f32.partialorder %v113, 8.507059e+37
    %v115 = vand.u32 %v103, 2147483648
    %v116 = vor.u32 1.1754944e-38, %v115
    %v117 = vsel %vm114, %v116, %v112
    %v118 = vmul.f32 1.0, %v117
    %vm119 = vcmask 15360
    %120 = vst.msk [vmem:[#allocation2] sm:$0xff] %vm119, %v118
    // Predicated region
    $region14: #{tpu_custom_call.1} parent=1 // pred_check
      _
    $region15: #{tpu_custom_call.1} parent=1 // pred_check_branch
      %122 = sbr.rel (0) target = $region17
    $region16: #{tpu_custom_call.1} parent=1 // pred_region
      %124 = vsyncadd [#allocation3], 96
      %s125 = sshll.u32 [#allocation2], 4
      %s126 = int_to_ptr.vmem [resolvable:$true] %s125
      %s127 = sshll.u32 %s3, 4
      %s128 = int_to_ptr.hbm [resolvable:$true] %s127
      %133 = dma.vmem_to_hbm [thread:$0]  %s126, 32, %s128, [#allocation3], 32, 32, 2
    $region17: #{tpu_custom_call.1} parent=1 // pred_fallthru
      _
    // Predicated region
    $region18: #{tpu_custom_call.1} parent=1 // pred_check
      _
    $region19: #{tpu_custom_call.1} parent=1 // pred_check_branch
      %135 = sbr.rel (0) target = $region21
    $region20: #{tpu_custom_call.1} parent=1 // pred_region
      %137 = dma.done [#allocation3], 128
    $region21: #{tpu_custom_call.1} parent=1 // pred_fallthru
      _
    %138 = vsyncpa [#allocation3], 1

</llo_original>
